<compile_context>
chip_gen: v7x
topology: tpu7x:2x2x1
jax: 0.10.0
libtpu: 0.0.40
codegen_flags: <defaults>
</compile_context>

<pallas_src>
import jax
import jax.numpy as jnp
from jax.experimental import pallas as pl
from jax.experimental.pallas import tpu as pltpu


# ----------------------------- kernel -------------------------------------- #

def lrp_fused_kernel(x_ref, w_ref, b_ref, g_ref, y_ref, r_ref, acc_ref):
    """Grid (i over M tiles, k over K tiles), k innermost (reduction).

    Per step: acc += x_tile @ W_tile (MXU) and rel_tile = x_tile * g_tile (VPU),
    with x_tile loaded from HBM exactly once.  y is written on the last k step.
    """
    k = pl.program_id(1)

    @pl.when(k == 0)
    def _():
        acc_ref[...] = jnp.zeros_like(acc_ref)

    x = x_ref[...]                                                # (tm, tk)
    acc_ref[...] += jnp.dot(x, w_ref[...],
                            preferred_element_type=jnp.float32)   # (tm, Np)
    r_ref[...] = (x * g_ref[...]).astype(r_ref.dtype)             # (tm, tk)

    @pl.when(k == pl.num_programs(1) - 1)
    def _():
        y_ref[...] = (acc_ref[...] + b_ref[...]).astype(y_ref.dtype)


# ----------------------------- wrapper -------------------------------------- #

def _round_up(x, m):
    return ((x + m - 1) // m) * m


def lrp_linear_fused(x, w_t, b, *, tm=256, tk=512):
    """Fused forward + LRP relevance for a wrapped nn.Linear.

    x:   (B, S, K) float32 activations
    w_t: (K, N)    weight, already transposed so the MXU sees x @ W
    b:   (N,)      bias
    Returns (y, rel) with shapes (B, S, N) and (B, S, K).
    """
    B, S, K = x.shape
    N = w_t.shape[1]
    M = B * S

    # Lane-dense padding (multiples of 128 on the last axis), sublane-safe M
    # tiling (multiple of 8), and a K padded to a whole number of tk tiles.
    N_p = _round_up(N, 128)
    K_p = _round_up(K, 128)
    if K_p <= tk:
        tk = K_p
    else:
        K_p = _round_up(K_p, tk)
    tm = _round_up(min(tm, _round_up(M, 8)), 8)
    M_p = _round_up(M, tm)

    x2 = x.reshape(M, K)
    if (M_p, K_p) != (M, K):
        x2 = jnp.pad(x2, ((0, M_p - M), (0, K_p - K)))
    w_p = w_t
    if (K_p, N_p) != (K, N):
        w_p = jnp.pad(w_t, ((0, K_p - K), (0, N_p - N)))
    b2 = jnp.pad(b, (0, N_p - N)).reshape(1, N_p)

    # Hoisted once: grad of sum(x @ W + b) w.r.t. x == column-sum of W, (1, Kp).
    g2 = jnp.sum(w_p, axis=1).reshape(1, K_p)

    grid = (M_p // tm, K_p // tk)

    cost = pl.CostEstimate(
        flops=2 * M_p * N_p * K_p,
        transcendentals=0,
        bytes_accessed=4 * (2 * M_p * K_p                    # x in, rel out
                            + (M_p // tm) * K_p * N_p        # W per M tile
                            + N_p + K_p                      # b, g
                            + M_p * N_p),                    # y out
    )

    y_p, r_p = pl.pallas_call(
        lrp_fused_kernel,
        out_shape=(
            jax.ShapeDtypeStruct((M_p, N_p), x.dtype),
            jax.ShapeDtypeStruct((M_p, K_p), x.dtype),
        ),
        grid=grid,
        in_specs=[
            pl.BlockSpec((tm, K_p if tk == K_p else tk), lambda i, k: (i, k)),  # x tile
            pl.BlockSpec((tk, N_p), lambda i, k: (k, 0)),                       # W tile
            pl.BlockSpec((1, N_p), lambda i, k: (0, 0)),                        # bias
            pl.BlockSpec((1, tk), lambda i, k: (0, k)),                         # colsum(W)
        ],
        out_specs=(
            pl.BlockSpec((tm, N_p), lambda i, k: (i, 0)),   # y tile (held across k)
            pl.BlockSpec((tm, tk), lambda i, k: (i, k)),    # rel tile (per step)
        ),
        scratch_shapes=[pltpu.VMEM((tm, N_p), jnp.float32)],
        compiler_params=pltpu.CompilerParams(
            # M tiles are independent (megacore on v7x); K is the reduction.
            dimension_semantics=("parallel", "arbitrary"),
        ),
        cost_estimate=cost,
    )(x2, w_p, b2, g2)

    y = y_p[:M, :N].reshape(B, S, N)
    rel = r_p[:M, :K].reshape(B, S, K)
    return y, rel


def lrp_linear_forward(x, w_t, b, *, tm=256, tk=512):
    """forward(x) of LRPLayer(nn.Linear) — numerics only (LRPTensor wrap is a no-op)."""
    y, _ = lrp_linear_fused(x, w_t, b, tm=tm, tk=tk)
    return y


def lrp_backpass(x, w_t, b, *, tm=256, tk=512):
    """relevance = input * d(sum(output))/d(input), per LRPLayer.lrp_backpass."""
    _, rel = lrp_linear_fused(x, w_t, b, tm=tm, tk=tk)
    return rel


# ------------------------------- main --------------------------------------- #

if __name__ == "__main__":
    B, S, H = 2, 8, 32  # batch, seq, hidden (nn.Linear(H, H) wrapped by LRPLayer)

    key = jax.random.PRNGKey(0)
    kx, kw, kb = jax.random.split(key, 3)

    x = jax.random.normal(kx, (B, S, H), dtype=jnp.float32)
    # Deterministic "nn.Linear(H, H)" parameters; torch stores (out, in) — keep
    # the kernel-facing copy pre-transposed to (in, out) so the MXU sees x @ W.
    w = jax.random.normal(kw, (H, H), dtype=jnp.float32) * 0.05
    b = jax.random.normal(kb, (H,), dtype=jnp.float32) * 0.01
    w_t = w.T

    # tm=8 exercises a multi-step M grid even at this toy size; at realistic
    # shapes use the defaults (tm=256, tk=512) which keep VMEM under the default
    # scoped limit even for H=4096 f32 on v7x's 64 MiB VMEM.
    y, rel = lrp_linear_fused(x, w_t, b, tm=8)
    jax.block_until_ready(y)
    jax.block_until_ready(rel)

    # Reference checks in plain JAX.
    y_ref = jnp.einsum("bsk,kn->bsn", x, w_t) + b
    rel_ref = x * jnp.sum(w_t, axis=1)
    assert jnp.allclose(y, y_ref, atol=1e-4, rtol=1e-4)
    assert jnp.allclose(rel, rel_ref, atol=1e-4, rtol=1e-4)

    # TODO(synk): LRPTensor bookkeeping (retain_grad, autograd graph retention) has
    # no Pallas equivalent; the numeric forward and grad*input relevance are implemented.
    print("KERNEL_OK")
</pallas_src>

<mosaic_0001>
module attributes {stable_mosaic.version = 11 : i64} {
  func.func @lrp_fused_kernel(%arg0: i32, %arg1: i32, %arg2: memref<8x128xf32, #tpu.memory_space<vmem>>, %arg3: memref<128x128xf32, #tpu.memory_space<vmem>>, %arg4: memref<1x128xf32, #tpu.memory_space<vmem>>, %arg5: memref<1x128xf32, #tpu.memory_space<vmem>>, %arg6: memref<8x128xf32, #tpu.memory_space<vmem>>, %arg7: memref<8x128xf32, #tpu.memory_space<vmem>>, %arg8: memref<8x128xf32, #tpu.memory_space<vmem>>) attributes {dimension_semantics = [#tpu.dimension_semantics<parallel>, #tpu.dimension_semantics<arbitrary>], iteration_bounds = array<i64: 2, 1>, scalar_prefetch = 0 : i64, scratch_operands = 1 : i64, tpu.core_type = #tpu.core_type<tc>, window_params = [{transform_indices = @transform_0, window_bounds = array<i64: 8, 128>}, {transform_indices = @transform_1, window_bounds = array<i64: 128, 128>}, {pipeline_mode = #tpu.pipeline_mode<synchronous>, transform_indices = @transform_2, window_bounds = array<i64: 1, 128>}, {transform_indices = @transform_3, window_bounds = array<i64: 1, 128>}, {transform_indices = @transform_4, window_bounds = array<i64: 8, 128>}, {transform_indices = @transform_5, window_bounds = array<i64: 8, 128>}]} {
    %c0_i32 = arith.constant 0 : i32
    %0 = arith.cmpi eq, %arg1, %c0_i32 : i32
    %1 = arith.extui %0 : i1 to i32
    %c0_i32_0 = arith.constant 0 : i32
    %2 = arith.cmpi ne, %1, %c0_i32_0 : i32
    scf.if %2 {
      %cst_14 = arith.constant 0.000000e+00 : f32
      %16 = vector.broadcast %cst_14 : f32 to vector<8x128xf32>
      %c0_15 = arith.constant 0 : index
      %c0_16 = arith.constant 0 : index
      %17 = vector.load %arg8[%c0_15, %c0_16] : memref<8x128xf32, #tpu.memory_space<vmem>>, vector<8x128xf32>
      tpu.vector_store %arg8[%c0_15, %c0_16], %16 {strides = array<i32>} : memref<8x128xf32, #tpu.memory_space<vmem>>, vector<8x128xf32>,
    } else {
    }
    %c0 = arith.constant 0 : index
    %c0_1 = arith.constant 0 : index
    %3 = vector.load %arg2[%c0, %c0_1] : memref<8x128xf32, #tpu.memory_space<vmem>>, vector<8x128xf32>
    %c0_2 = arith.constant 0 : index
    %c0_3 = arith.constant 0 : index
    %4 = vector.load %arg8[%c0_2, %c0_3] : memref<8x128xf32, #tpu.memory_space<vmem>>, vector<8x128xf32>
    %c0_4 = arith.constant 0 : index
    %c0_5 = arith.constant 0 : index
    %5 = vector.load %arg3[%c0_4, %c0_5] : memref<128x128xf32, #tpu.memory_space<vmem>>, vector<128x128xf32>
    %cst = arith.constant dense<0.000000e+00> : vector<8x128xf32>
    %6 = tpu.matmul %3, %5, %cst {dimension_numbers = #tpu.dot_dimension_numbers<[1], [0], [0], [1], [0, 0, 1, 1], [], []>} : vector<8x128xf32>, vector<128x128xf32>, vector<8x128xf32> -> vector<8x128xf32>
    %7 = arith.addf %4, %6 : vector<8x128xf32>
    %c0_6 = arith.constant 0 : index
    %c0_7 = arith.constant 0 : index
    %8 = vector.load %arg8[%c0_6, %c0_7] : memref<8x128xf32, #tpu.memory_space<vmem>>, vector<8x128xf32>
    tpu.vector_store %arg8[%c0_6, %c0_7], %7 {strides = array<i32>} : memref<8x128xf32, #tpu.memory_space<vmem>>, vector<8x128xf32>,
    %c0_8 = arith.constant 0 : index
    %c0_9 = arith.constant 0 : index
    %9 = vector.load %arg5[%c0_8, %c0_9] : memref<1x128xf32, #tpu.memory_space<vmem>>, vector<1x128xf32>
    %10 = vector.broadcast %9 : vector<1x128xf32> to vector<8x128xf32>
    %11 = arith.mulf %3, %10 : vector<8x128xf32>
    %c0_10 = arith.constant 0 : index
    %c0_11 = arith.constant 0 : index
    %12 = vector.load %arg7[%c0_10, %c0_11] : memref<8x128xf32, #tpu.memory_space<vmem>>, vector<8x128xf32>
    tpu.vector_store %arg7[%c0_10, %c0_11], %11 {strides = array<i32>} : memref<8x128xf32, #tpu.memory_space<vmem>>, vector<8x128xf32>,
    %c0_i32_12 = arith.constant 0 : i32
    %13 = arith.cmpi eq, %arg1, %c0_i32_12 : i32
    %14 = arith.extui %13 : i1 to i32
    %c0_i32_13 = arith.constant 0 : i32
    %15 = arith.cmpi ne, %14, %c0_i32_13 : i32
    scf.if %15 {
      %c0_14 = arith.constant 0 : index
      %c0_15 = arith.constant 0 : index
      %16 = vector.load %arg8[%c0_14, %c0_15] : memref<8x128xf32, #tpu.memory_space<vmem>>, vector<8x128xf32>
      %c0_16 = arith.constant 0 : index
      %c0_17 = arith.constant 0 : index
      %17 = vector.load %arg4[%c0_16, %c0_17] : memref<1x128xf32, #tpu.memory_space<vmem>>, vector<1x128xf32>
      %18 = vector.broadcast %17 : vector<1x128xf32> to vector<8x128xf32>
      %19 = arith.addf %16, %18 : vector<8x128xf32>
      %c0_18 = arith.constant 0 : index
      %c0_19 = arith.constant 0 : index
      %20 = vector.load %arg6[%c0_18, %c0_19] : memref<8x128xf32, #tpu.memory_space<vmem>>, vector<8x128xf32>
      tpu.vector_store %arg6[%c0_18, %c0_19], %19 {strides = array<i32>} : memref<8x128xf32, #tpu.memory_space<vmem>>, vector<8x128xf32>,
    } else {
    }
    return
  }
  func.func @transform_0(%arg0: i32, %arg1: i32) -> (i32, i32) {
    %c0_i32 = arith.constant 0 : i32
    return %arg0, %arg1 : i32, i32
  }
  func.func @transform_1(%arg0: i32, %arg1: i32) -> (i32, i32) {
    %c0_i32 = arith.constant 0 : i32
    %c0_i32_0 = arith.constant 0 : i32
    return %arg1, %c0_i32 : i32, i32
  }
  func.func @transform_2(%arg0: i32, %arg1: i32) -> (i32, i32) {
    %c0_i32 = arith.constant 0 : i32
    %c0_i32_0 = arith.constant 0 : i32
    %c0_i32_1 = arith.constant 0 : i32
    return %c0_i32, %c0_i32_0 : i32, i32
  }
  func.func @transform_3(%arg0: i32, %arg1: i32) -> (i32, i32) {
    %c0_i32 = arith.constant 0 : i32
    %c0_i32_0 = arith.constant 0 : i32
    return %c0_i32, %arg1 : i32, i32
  }
  func.func @transform_4(%arg0: i32, %arg1: i32) -> (i32, i32) {
    %c0_i32 = arith.constant 0 : i32
    %c0_i32_0 = arith.constant 0 : i32
    return %arg0, %c0_i32 : i32, i32
  }
  func.func @transform_5(%arg0: i32, %arg1: i32) -> (i32, i32) {
    %c0_i32 = arith.constant 0 : i32
    return %arg0, %arg1 : i32, i32
  }
}

</mosaic_0001>

<llo_original>
// kernel: tpu_custom_call.1
$region0: #{tpu_custom_call.1}
  #allocation0 [shape = 'u32[]', space=smem, size = 0x4, offset = 0x4, fixed_abs, tag = 'smem constant byte address 0x4 - core index']
  #allocation1 [shape = 'u32[144,128]{1,0:T(1,128)}', space=vmem, size = 0x12000, scoped, tag = 'internal scratch']
  #allocation2 [shape = 'f32[8,128]{1,0:T(8,128)}', space=vmem, size = 0x1000, scoped, tag = 'scratch operand']
  %s0 = inlined_call_operand.hbm [shape: f32[16,128], index: 0, kind: input, shape index: {}]
  %s1 = inlined_call_operand.hbm [shape: f32[128,128], index: 1, kind: input, shape index: {}]
  %s2 = inlined_call_operand.vmem [shape: f32[1,128], index: 2, kind: input, shape index: {}]
  %s3 = inlined_call_operand.vmem [shape: f32[1,128], index: 3, kind: input, shape index: {}]
  %s4 = inlined_call_operand.hbm [shape: f32[16,128], index: 4, kind: output, shape index: {0}]
  %s5 = inlined_call_operand.hbm [shape: f32[16,128], index: 5, kind: output, shape index: {1}]
  %6 = xla_tuple %s4, %s5
  %s7 = sld [smem:[#allocation0]]
  $region73: #{tpu_custom_call.1} parent=0
    _
  %s9 = ssub.s32 1, %s7
  %s10 = scalar_select 0, %s9, %s7
  $region1: #{tpu_custom_call.1} parent=0
    #allocation3 [shape = 'u8[8192]{0}', space=vmem, size = 0x2000, scoped, tag = 'input window, operand 0']
    #allocation4 [shape = 's32[2]{0}', space=sflag, size = 0x8, scoped, tag = 'scoped memory for tpu_custom_call.1']
    #allocation5 [shape = 's32[2]{0}', space=sflag, size = 0x8, scoped, tag = 'scoped memory for tpu_custom_call.1']
    #allocation6 [shape = 'u8[65536]{0}', space=vmem, size = 0x10000, scoped, tag = 'input window, operand 1, single buffered']
    #allocation7 [shape = 's32[1]{0}', space=sflag, size = 0x4, scoped, tag = 'scoped memory for tpu_custom_call.1']
    #allocation8 [shape = 'u8[8192]{0}', space=vmem, size = 0x2000, scoped, tag = 'output window, operand 0']
    #allocation9 [shape = 'u8[8192]{0}', space=vmem, size = 0x2000, scoped, tag = 'output window, operand 1']
    #allocation10 [shape = 's32[2]{0}', space=sflag, size = 0x8, scoped, tag = 'scoped memory for tpu_custom_call.1']
    %11 = vsyncpa [#allocation4], 0
    %s12 = scalar_lea.sflag [#allocation4], 1
    %13 = vsyncpa %s12, 0
    %14 = vsyncpa [#allocation7], 0
    %15 = vsyncpa [#allocation5], 0
    %s16 = scalar_lea.sflag [#allocation5], 1
    %17 = vsyncpa %s16, 0
    %18 = vsyncpa [#allocation10], 0
    %s19 = scalar_lea.sflag [#allocation10], 1
    %20 = vsyncpa %s19, 0
    loop: start=0, step=1, limit=4
    $region2: #{tpu_custom_call.1} parent=1 // loop_pre_header
      _
    $region3: #{tpu_custom_call.1} parent=1 // loop_header
      %s22 = sphi 0, %s26
      %p23 = scmp.ge.s32.totalorder %s22, 4
      %s29 = sphi 0, %s41
      %s30 = sphi 0, %s37
      %s31 = sphi 0, %s29
      %s32 = sphi 0, %s30
      %s33 = sphi 0, %s31
      %s34 = sphi 0, %s32
      %s46 = sphi 0, %s48
      %s49 = sphi 0, %s46
      %s50 = sphi 0, %s49
      %s66 = sphi 0, %s50
      %s72 = sphi 0, %s74
      %s75 = sphi 0, %s72
      %s76 = sphi 0, %s75
      %s92 = sphi 0, %s76
      %s96 = sphi 0, %s96
      %s98 = sphi 0, %s96
      %s99 = sphi 0, %s98
      %s113 = sphi 0, %s99
      %s119 = sphi 0, %s121
      %s122 = sphi 0, %s119
      %s123 = sphi 0, %s122
      %s139 = sphi 0, %s123
      %s145 = sphi 0, %s147
      %s148 = sphi 0, %s145
      %s149 = sphi 0, %s148
      %s165 = sphi 0, %s149
      %s173 = sphi 0, %s175
      %s176 = sphi 0, %s173
      %s177 = sphi 0, %s176
      %s193 = sphi 0, %s177
    $region4: #{tpu_custom_call.1} parent=1 // loop_header_branch
      %25 = sbr.rel (%p23) target = $region8
    $region5: #{tpu_custom_call.1} parent=1 // loop_body
      %s27 = ssub.s32 %s22, 1
      %s28 = ssub.s32 %s22, 2
      %s35 = sadd.s32 1, %s30
      %p36 = scmp.ge.s32.totalorder %s35, 1
      %s37 = scalar_select %p36, 0, %s35
      %s38 = sadd.s32 1, %s29
      %s39 = scalar_select %p36, %s38, %s29
      %p40 = scmp.ge.s32.totalorder %s39, 2
      %s41 = scalar_select %p40, 0, %s39
      %s42 = ssub.s32 %s29, %s41
      %s43 = ssub.s32 %s30, %s37
      %s44 = sor.u32 %s42, %s43
      %p45 = scmp.eq.s32.totalorder %s44, 0
      %s47 = sadd.s32 %s46, 1
      %s48 = scalar_select %p45, %s46, %s47
      %p51 = pneg %p45
      %p52 = scmp.eq.s32.totalorder %s22, 1
      %p53 = por %p51, %p52
      %p54 = scmp.ne.s32.totalorder %s46, %s49
      %p55 = scmp.eq.s32.totalorder %s22, 0
      %p56 = por %p54, %p55
      %p57 = scmp.ne.s32.totalorder %s46, %s49
      %p58 = scmp.eq.s32.totalorder %s27, 1
      %p59 = por %p57, %p58
      %p60 = scmp.ne.s32.totalorder %s49, %s50
      %p61 = scmp.eq.s32.totalorder %s27, 0
      %p62 = por %p60, %p61
      %p63 = scmp.ne.s32.totalorder %s49, %s50
      %p64 = scmp.eq.s32.totalorder %s28, 1
      %p65 = por %p63, %p64
      %p67 = scmp.ne.s32.totalorder %s50, %s66
      %p68 = scmp.eq.s32.totalorder %s28, 0
      %p69 = por %p67, %p68
      %s70 = ssub.s32 %s30, %s37
      %p71 = scmp.eq.s32.totalorder %s70, 0
      %s73 = sadd.s32 %s72, 1
      %s74 = scalar_select %p71, %s72, %s73
      %p77 = pneg %p71
      %p78 = scmp.eq.s32.totalorder %s22, 1
      %p79 = por %p77, %p78
      %p80 = scmp.ne.s32.totalorder %s72, %s75
      %p81 = scmp.eq.s32.totalorder %s22, 0
      %p82 = por %p80, %p81
      %p83 = scmp.ne.s32.totalorder %s72, %s75
      %p84 = scmp.eq.s32.totalorder %s27, 1
      %p85 = por %p83, %p84
      %p86 = scmp.ne.s32.totalorder %s75, %s76
      %p87 = scmp.eq.s32.totalorder %s27, 0
      %p88 = por %p86, %p87
      %p89 = scmp.ne.s32.totalorder %s75, %s76
      %p90 = scmp.eq.s32.totalorder %s28, 1
      %p91 = por %p89, %p90
      %p93 = scmp.ne.s32.totalorder %s76, %s92
      %p94 = scmp.eq.s32.totalorder %s28, 0
      %p95 = por %p93, %p94
      %s97 = sadd.s32 %s96, 1
      %p100 = scmp.eq.s32.totalorder %s22, 1
      %p101 = scmp.ne.s32.totalorder %s96, %s98
      %p102 = scmp.eq.s32.totalorder %s22, 0
      %p103 = por %p101, %p102
      %p104 = scmp.ne.s32.totalorder %s96, %s98
      %p105 = scmp.eq.s32.totalorder %s27, 1
      %p106 = por %p104, %p105
      %p107 = scmp.ne.s32.totalorder %s98, %s99
      %p108 = scmp.eq.s32.totalorder %s27, 0
      %p109 = por %p107, %p108
      %p110 = scmp.ne.s32.totalorder %s98, %s99
      %p111 = scmp.eq.s32.totalorder %s28, 1
      %p112 = por %p110, %p111
      %p114 = scmp.ne.s32.totalorder %s99, %s113
      %p115 = scmp.eq.s32.totalorder %s28, 0
      %p116 = por %p114, %p115
      %s117 = ssub.s32 %s30, %s37
      %p118 = scmp.eq.s32.totalorder %s117, 0
      %s120 = sadd.s32 %s119, 1
      %s121 = scalar_select %p118, %s119, %s120
      %p124 = pneg %p118
      %p125 = scmp.eq.s32.totalorder %s22, 1
      %p126 = por %p124, %p125
      %p127 = scmp.ne.s32.totalorder %s119, %s122
      %p128 = scmp.eq.s32.totalorder %s22, 0
      %p129 = por %p127, %p128
      %p130 = scmp.ne.s32.totalorder %s119, %s122
      %p131 = scmp.eq.s32.totalorder %s27, 1
      %p132 = por %p130, %p131
      %p133 = scmp.ne.s32.totalorder %s122, %s123
      %p134 = scmp.eq.s32.totalorder %s27, 0
      %p135 = por %p133, %p134
      %p136 = scmp.ne.s32.totalorder %s122, %s123
      %p137 = scmp.eq.s32.totalorder %s28, 1
      %p138 = por %p136, %p137
      %p140 = scmp.ne.s32.totalorder %s123, %s139
      %p141 = scmp.eq.s32.totalorder %s28, 0
      %p142 = por %p140, %p141
      %s143 = ssub.s32 %s29, %s41
      %p144 = scmp.eq.s32.totalorder %s143, 0
      %s146 = sadd.s32 %s145, 1
      %s147 = scalar_select %p144, %s145, %s146
      %p150 = pneg %p144
      %p151 = scmp.eq.s32.totalorder %s22, 1
      %p152 = por %p150, %p151
      %p153 = scmp.ne.s32.totalorder %s145, %s148
      %p154 = scmp.eq.s32.totalorder %s22, 0
      %p155 = por %p153, %p154
      %p156 = scmp.ne.s32.totalorder %s145, %s148
      %p157 = scmp.eq.s32.totalorder %s27, 1
      %p158 = por %p156, %p157
      %p159 = scmp.ne.s32.totalorder %s148, %s149
      %p160 = scmp.eq.s32.totalorder %s27, 0
      %p161 = por %p159, %p160
      %p162 = scmp.ne.s32.totalorder %s148, %s149
      %p163 = scmp.eq.s32.totalorder %s28, 1
      %p164 = por %p162, %p163
      %p166 = scmp.ne.s32.totalorder %s149, %s165
      %p167 = scmp.eq.s32.totalorder %s28, 0
      %p168 = por %p166, %p167
      %s169 = ssub.s32 %s29, %s41
      %s170 = ssub.s32 %s30, %s37
      %s171 = sor.u32 %s169, %s170
      %p172 = scmp.eq.s32.totalorder %s171, 0
      %s174 = sadd.s32 %s173, 1
      %s175 = scalar_select %p172, %s173, %s174
      %p178 = pneg %p172
      %p179 = scmp.eq.s32.totalorder %s22, 1
      %p180 = por %p178, %p179
      %p181 = scmp.ne.s32.totalorder %s173, %s176
      %p182 = scmp.eq.s32.totalorder %s22, 0
      %p183 = por %p181, %p182
      %p184 = scmp.ne.s32.totalorder %s173, %s176
      %p185 = scmp.eq.s32.totalorder %s27, 1
      %p186 = por %p184, %p185
      %p187 = scmp.ne.s32.totalorder %s176, %s177
      %p188 = scmp.eq.s32.totalorder %s27, 0
      %p189 = por %p187, %p188
      %p190 = scmp.ne.s32.totalorder %s176, %s177
      %p191 = scmp.eq.s32.totalorder %s28, 1
      %p192 = por %p190, %p191
      %p194 = scmp.ne.s32.totalorder %s177, %s193
      %p195 = scmp.eq.s32.totalorder %s28, 0
      %p196 = por %p194, %p195
      %p197 = scmp.le.s32.totalorder 1, %s22
      %p198 = scmp.lt.s32.totalorder %s22, 3
      %p199 = pnand %p197, %p198
      %p200 = pneg %p199
      // Predicated region
      $region9: #{tpu_custom_call.1} parent=5 // pred_check
        _
      $region10: #{tpu_custom_call.1} parent=5 // pred_check_branch
        %202 = sbr.rel (%p199) target = $region12
      $region11: #{tpu_custom_call.1} parent=5 // pred_region
        %s203 = ssub.s32 %s22, 1
        // Predicated region
        $region13: #{tpu_custom_call.1} parent=11 // pred_check
          %p204 = pneg %p88
        $region14: #{tpu_custom_call.1} parent=11 // pred_check_branch
          %206 = sbr.rel (%p204) target = $region16
        $region15: #{tpu_custom_call.1} parent=11 // pred_region
          %s207 = smul.u32 16, %s32
          %s209 = ssub.s32 2048, 2048
          %210 = vsyncadd [#allocation7], %s209
          %s211 = smul.addr %s207, 128
          %s212 = scalar_lea.hbm %s1, %s211
          %s213 = sshll.u32 [#allocation6], 4
          %s214 = int_to_ptr.vmem [resolvable:$true] %s213
          %219 = dma.hbm_to_vmem [thread:$0]  %s212, 2048, %s214, [#allocation7], 128, 128, 8
        $region16: #{tpu_custom_call.1} parent=11 // pred_fallthru
          _
        // Predicated region
        $region17: #{tpu_custom_call.1} parent=11 // pred_check
          %p220 = pneg %p109
        $region18: #{tpu_custom_call.1} parent=11 // pred_check_branch
          %222 = sbr.rel (%p220) target = $region20
        $region19: #{tpu_custom_call.1} parent=11 // pred_region
          _
        $region20: #{tpu_custom_call.1} parent=11 // pred_fallthru
          _
        // Predicated region
        $region21: #{tpu_custom_call.1} parent=11 // pred_check
          %p223 = pneg %p135
        $region22: #{tpu_custom_call.1} parent=11 // pred_check_branch
          %225 = sbr.rel (%p223) target = $region24
        $region23: #{tpu_custom_call.1} parent=11 // pred_region
          %p226 = scmp.lt.s32.totalorder %s32, 0
          %s227 = scalar_select %p226, %s32, 0
          %s228 = scalar_lea.vmem %s3, %s227
        $region24: #{tpu_custom_call.1} parent=11 // pred_fallthru
          _
      $region12: #{tpu_custom_call.1} parent=5 // pred_fallthru
        _
      %p229 = scmp.lt.s32.totalorder %s22, 2
      // Predicated region
      $region25: #{tpu_custom_call.1} parent=5 // pred_check
        %p230 = pneg %p229
      $region26: #{tpu_custom_call.1} parent=5 // pred_check_branch
        %232 = sbr.rel (%p230) target = $region28
      $region27: #{tpu_custom_call.1} parent=5 // pred_region
        // Predicated region
        $region29: #{tpu_custom_call.1} parent=27 // pred_check
          %p233 = pneg %p56
        $region30: #{tpu_custom_call.1} parent=27 // pred_check_branch
          %235 = sbr.rel (%p233) target = $region32
        $region31: #{tpu_custom_call.1} parent=27 // pred_region
          %s236 = sand.u32 %s46, 1
          %s237 = scalar_lea.sflag [#allocation4], %s236
          %s238 = sand.u32 %s46, 1
          %s239 = smul.addr %s238, 8
          %s240 = scalar_lea.vmem [#allocation3], %s239
          %s242 = ssub.s32 128, 128
          %243 = vsyncadd %s237, %s242
          %s244 = sadd.s32 %s30, %s29
          %s245 = smul.addr %s244, 128
          %s246 = scalar_lea.hbm %s0, %s245
          %s248 = sshll.u32 %s240, 4
          %s249 = int_to_ptr.vmem [resolvable:$true] %s248
          %251 = dma.hbm_to_vmem [thread:$0]  %s246, 128, %s249, %s237
        $region32: #{tpu_custom_call.1} parent=27 // pred_fallthru
          _
      $region28: #{tpu_custom_call.1} parent=5 // pred_fallthru
        _
      %p252 = scmp.le.s32.totalorder 1, %s22
      %p253 = scmp.lt.s32.totalorder %s22, 3
      %p254 = pnand %p252, %p253
      %p255 = pneg %p254
      // Predicated region
      $region33: #{tpu_custom_call.1} parent=5 // pred_check
        _
      $region34: #{tpu_custom_call.1} parent=5 // pred_check_branch
        %257 = sbr.rel (%p254) target = $region36
      $region35: #{tpu_custom_call.1} parent=5 // pred_region
        %s258 = ssub.s32 %s22, 1
        %s259 = sand.u32 %s49, 1
        %s260 = scalar_lea.sflag [#allocation4], %s259
        %s261 = sand.u32 %s49, 1
        %s262 = smul.addr %s261, 8
        %s263 = scalar_lea.vmem [#allocation3], %s262
        // Predicated region
        $region37: #{tpu_custom_call.1} parent=35 // pred_check
          %p264 = pneg %p62
        $region38: #{tpu_custom_call.1} parent=35 // pred_check_branch
          %266 = sbr.rel (%p264) target = $region40
        $region39: #{tpu_custom_call.1} parent=35 // pred_region
          %267 = dma.done %s260, 128
        $region40: #{tpu_custom_call.1} parent=35 // pred_fallthru
          _
        // Predicated region
        $region41: #{tpu_custom_call.1} parent=35 // pred_check
          %p268 = pneg %p88
        $region42: #{tpu_custom_call.1} parent=35 // pred_check_branch
          %270 = sbr.rel (%p268) target = $region44
        $region43: #{tpu_custom_call.1} parent=35 // pred_region
          %271 = dma.done [#allocation7], 2048
        $region44: #{tpu_custom_call.1} parent=35 // pred_fallthru
          _
        %s272 = sand.u32 %s49, 1
        %s273 = scalar_lea.sflag [#allocation4], %s272
        %s274 = sand.u32 %s49, 1
        %s275 = smul.addr %s274, 8
        %s276 = scalar_lea.vmem [#allocation3], %s275
        %p277 = pneg %p62
        %p278 = pneg %p59
        %p279 = pneg %p88
        %p280 = pneg %p85
        %p281 = pneg %p109
        %p282 = pneg %p106
        %p283 = scmp.lt.s32.totalorder %s32, 0
        %s284 = scalar_select %p283, %s32, 0
        %s285 = scalar_lea.vmem %s3, %s284
        %p286 = pneg %p135
        %p287 = pneg %p132
        %p288 = pneg %p161
        %p289 = pneg %p158
        %s290 = sand.u32 %s148, 1
        %s291 = scalar_lea.sflag [#allocation5], %s290
        %s292 = sand.u32 %s148, 1
        %s293 = smul.addr %s292, 8
        %s294 = scalar_lea.vmem [#allocation8], %s293
        %p295 = pneg %p189
        %p296 = pneg %p186
        %s297 = sand.u32 %s176, 1
        %s298 = scalar_lea.sflag [#allocation10], %s297
        %s299 = sand.u32 %s176, 1
        %s300 = smul.addr %s299, 8
        %s301 = scalar_lea.vmem [#allocation9], %s300
        %s302 = smul.u32 16, %s32
        %p303 = scmp.lt.s32.totalorder %s32, 0
        %s304 = scalar_select %p303, %s32, 0
        %s305 = scalar_lea.vmem %s3, %s304
        %p306 = scmp.eq.s32.totalorder %s32, 0
        // Predicated region
        $region45: #{tpu_custom_call.1} parent=35 // pred_check
          %p307 = pneg %p306
        $region46: #{tpu_custom_call.1} parent=35 // pred_check_branch
          %309 = sbr.rel (%p307) target = $region48
        $region47: #{tpu_custom_call.1} parent=35 // pred_region
          %310 = vst [vmem:[#allocation2] sm:$0xff] 0.0
        $region48: #{tpu_custom_call.1} parent=35 // pred_fallthru
          _
        %v311 = vld [vmem:[%s263] sm:$0xff]
        %v312 = vld [vmem:[#allocation2] sm:$0xff]
        %v313 = vld [vmem:[#allocation6] sm:$0xff]
        %v314 = vld [vmem:[#allocation6 + $0x8] sm:$0xff]
        %v315 = vld [vmem:[#allocation6 + $0x10] sm:$0xff]
        %v316 = vld [vmem:[#allocation6 + $0x18] sm:$0xff]
        %v317 = vld [vmem:[#allocation6 + $0x20] sm:$0xff]
        %v318 = vld [vmem:[#allocation6 + $0x28] sm:$0xff]
        %v319 = vld [vmem:[#allocation6 + $0x30] sm:$0xff]
        %v320 = vld [vmem:[#allocation6 + $0x38] sm:$0xff]
        %v321 = vld [vmem:[#allocation6 + $0x40] sm:$0xff]
        %v322 = vld [vmem:[#allocation6 + $0x48] sm:$0xff]
        %v323 = vld [vmem:[#allocation6 + $0x50] sm:$0xff]
        %v324 = vld [vmem:[#allocation6 + $0x58] sm:$0xff]
        %v325 = vld [vmem:[#allocation6 + $0x60] sm:$0xff]
        %v326 = vld [vmem:[#allocation6 + $0x68] sm:$0xff]
        %v327 = vld [vmem:[#allocation6 + $0x70] sm:$0xff]
        %v328 = vld [vmem:[#allocation6 + $0x78] sm:$0xff]
        %329 = vmatprep.subr.mxu0 0.0
        %330 = vmatpush1.msra.mxu0 %v313
        %331 = vmatprep.subr.mxu0 0.0
        %332 = vmatpush1.msra.mxu0 %v314
        %333 = vmatprep.subr.mxu0 0.0
        %334 = vmatpush1.msra.mxu0 %v315
        %335 = vmatprep.subr.mxu0 0.0
        %336 = vmatpush1.msra.mxu0 %v316
        %337 = vmatprep.subr.mxu0 0.0
        %338 = vmatpush1.msra.mxu0 %v317
        %339 = vmatprep.subr.mxu0 0.0
        %340 = vmatpush1.msra.mxu0 %v318
        %341 = vmatprep.subr.mxu0 0.0
        %342 = vmatpush1.msra.mxu0 %v319
        %343 = vmatprep.subr.mxu0 0.0
        %344 = vmatpush1.msra.mxu0 %v320
        %345 = vmatprep.subr.mxu0 0.0
        %346 = vmatpush1.msra.mxu0 %v321
        %347 = vmatprep.subr.mxu0 0.0
        %348 = vmatpush1.msra.mxu0 %v322
        %349 = vmatprep.subr.mxu0 0.0
        %350 = vmatpush1.msra.mxu0 %v323
        %351 = vmatprep.subr.mxu0 0.0
        %352 = vmatpush1.msra.mxu0 %v324
        %353 = vmatprep.subr.mxu0 0.0
        %354 = vmatpush1.msra.mxu0 %v325
        %355 = vmatprep.subr.mxu0 0.0
        %356 = vmatpush1.msra.mxu0 %v326
        %357 = vmatprep.subr.mxu0 0.0
        %358 = vmatpush1.msra.mxu0 %v327
        %359 = vmatprep.subr.mxu0 0.0
        %360 = vmatpush1.msra.mxu0 %v328
        %361 = vmatprep.subr.mxu0 0.0
        %362 = vmatpush1.msra.mxu0 0.0
        %363 = vmatprep.subr.mxu0 0.0
        %364 = vmatpush1.msra.mxu0 0.0
        %365 = vmatprep.subr.mxu0 0.0
        %366 = vmatpush1.msra.mxu0 0.0
        %367 = vmatprep.subr.mxu0 0.0
        %368 = vmatpush1.msra.mxu0 0.0
        %369 = vmatprep.subr.mxu0 0.0
        %370 = vmatpush1.msra.mxu0 0.0
        %371 = vmatprep.subr.mxu0 0.0
        %372 = vmatpush1.msra.mxu0 0.0
        %373 = vmatprep.subr.mxu0 0.0
        %374 = vmatpush1.msra.mxu0 0.0
        %375 = vmatprep.subr.mxu0 0.0
        %376 = vmatpush1.msra.mxu0 0.0
        %377 = vmatprep.subr.mxu0 0.0
        %378 = vmatpush1.msra.mxu0 0.0
        %379 = vmatprep.subr.mxu0 0.0
        %380 = vmatpush1.msra.mxu0 0.0
        %381 = vmatprep.subr.mxu0 0.0
        %382 = vmatpush1.msra.mxu0 0.0
        %383 = vmatprep.subr.mxu0 0.0
        %384 = vmatpush1.msra.mxu0 0.0
        %385 = vmatprep.subr.mxu0 0.0
        %386 = vmatpush1.msra.mxu0 0.0
        %387 = vmatprep.subr.mxu0 0.0
        %388 = vmatpush1.msra.mxu0 0.0
        %389 = vmatprep.subr.mxu0 0.0
        %390 = vmatpush1.msra.mxu0 0.0
        %391 = vmatprep.subr.mxu0 0.0
        %392 = vmatpush1.msra.mxu0 0.0
        %393 = vmatprep.mubr.f32.mxu0 0.0
        %394 = vmatmul.mubr.f32.gmra.mrb[0].mxu0 %v311
        %v395 = vpop.f32.mrb[0].mxu0
        %v396 = vadd.f32 0.0, %v395
        %v397 = vpop.f32.mrb[0].mxu0
        %398 = vdwg.mxu0
        %v399 = vadd.f32 %v312, %v396
        %400 = vst [vmem:[#allocation2] sm:$0xff] %v399
        %v401 = vld [vmem:[%s305] sm:$0x1]
        %v403 = vlaneseq
        %v404 = vshrl.u32 %v403, 7
        %v405 = vsub.s32 0, %v404
        %v406 = vrot.slane %v401, %v405
        %v408 = vmul.f32 %v311, %v406
        %409 = vst [vmem:[%s301] sm:$0xff] %v408
        // Predicated region
        $region49: #{tpu_custom_call.1} parent=35 // pred_check
          %p410 = pneg %p306
        $region50: #{tpu_custom_call.1} parent=35 // pred_check_branch
          %412 = sbr.rel (%p410) target = $region52
        $region51: #{tpu_custom_call.1} parent=35 // pred_region
          %v413 = vld [vmem:[#allocation2] sm:$0xff]
          %v414 = vld [vmem:[%s2] sm:$0x1]
          %v416 = vlaneseq
          %v417 = vshrl.u32 %v416, 7
          %v418 = vsub.s32 0, %v417
          %v419 = vrot.slane %v414, %v418
          %v421 = vadd.f32 %v413, %v419
          %422 = vst [vmem:[%s294] sm:$0xff] %v421
        $region52: #{tpu_custom_call.1} parent=35 // pred_fallthru
          _
        %s423 = sand.u32 %s148, 1
        %s424 = scalar_lea.sflag [#allocation5], %s423
        %s425 = sand.u32 %s148, 1
        %s426 = smul.addr %s425, 8
        %s427 = scalar_lea.vmem [#allocation8], %s426
        %s428 = sand.u32 %s176, 1
        %s429 = scalar_lea.sflag [#allocation10], %s428
        %s430 = sand.u32 %s176, 1
        %s431 = smul.addr %s430, 8
        %s432 = scalar_lea.vmem [#allocation9], %s431
        // Predicated region
        $region53: #{tpu_custom_call.1} parent=35 // pred_check
          %p433 = pneg %p158
        $region54: #{tpu_custom_call.1} parent=35 // pred_check_branch
          %435 = sbr.rel (%p433) target = $region56
        $region55: #{tpu_custom_call.1} parent=35 // pred_region
          %s437 = ssub.s32 128, 128
          %438 = vsyncadd %s424, %s437
          %s439 = smul.addr %s31, 128
          %s440 = scalar_lea.hbm %s4, %s439
          %s442 = sshll.u32 %s427, 4
          %s443 = int_to_ptr.vmem [resolvable:$true] %s442
          %445 = dma.vmem_to_hbm [thread:$0]  %s443, 128, %s440, %s424
        $region56: #{tpu_custom_call.1} parent=35 // pred_fallthru
          _
        // Predicated region
        $region57: #{tpu_custom_call.1} parent=35 // pred_check
          %p446 = pneg %p186
        $region58: #{tpu_custom_call.1} parent=35 // pred_check_branch
          %448 = sbr.rel (%p446) target = $region60
        $region59: #{tpu_custom_call.1} parent=35 // pred_region
          %s450 = ssub.s32 128, 128
          %451 = vsyncadd %s429, %s450
          %s452 = sadd.s32 %s32, %s31
          %s453 = smul.addr %s452, 128
          %s454 = scalar_lea.hbm %s5, %s453
          %s456 = sshll.u32 %s432, 4
          %s457 = int_to_ptr.vmem [resolvable:$true] %s456
          %459 = dma.vmem_to_hbm [thread:$0]  %s457, 128, %s454, %s429
        $region60: #{tpu_custom_call.1} parent=35 // pred_fallthru
          _
      $region36: #{tpu_custom_call.1} parent=5 // pred_fallthru
        _
      %p460 = scmp.le.s32.totalorder 2, %s22
      // Predicated region
      $region61: #{tpu_custom_call.1} parent=5 // pred_check
        %p461 = pneg %p460
      $region62: #{tpu_custom_call.1} parent=5 // pred_check_branch
        %463 = sbr.rel (%p461) target = $region64
      $region63: #{tpu_custom_call.1} parent=5 // pred_region
        %s464 = ssub.s32 %s22, 2
        // Predicated region
        $region65: #{tpu_custom_call.1} parent=63 // pred_check
          %p465 = pneg %p164
        $region66: #{tpu_custom_call.1} parent=63 // pred_check_branch
          %467 = sbr.rel (%p465) target = $region68
        $region67: #{tpu_custom_call.1} parent=63 // pred_region
          %s468 = sand.u32 %s149, 1
          %s469 = scalar_lea.sflag [#allocation5], %s468
          %s470 = sand.u32 %s149, 1
          %s471 = smul.addr %s470, 8
          %s472 = scalar_lea.vmem [#allocation8], %s471
          %473 = dma.done %s469, 128
        $region68: #{tpu_custom_call.1} parent=63 // pred_fallthru
          _
        // Predicated region
        $region69: #{tpu_custom_call.1} parent=63 // pred_check
          %p474 = pneg %p192
        $region70: #{tpu_custom_call.1} parent=63 // pred_check_branch
          %476 = sbr.rel (%p474) target = $region72
        $region71: #{tpu_custom_call.1} parent=63 // pred_region
          %s477 = sand.u32 %s177, 1
          %s478 = scalar_lea.sflag [#allocation10], %s477
          %s479 = sand.u32 %s177, 1
          %s480 = smul.addr %s479, 8
          %s481 = scalar_lea.vmem [#allocation9], %s480
          %482 = dma.done %s478, 128
        $region72: #{tpu_custom_call.1} parent=63 // pred_fallthru
          _
      $region64: #{tpu_custom_call.1} parent=5 // pred_fallthru
        _
    $region6: #{tpu_custom_call.1} parent=1 // loop_footer
      %s26 = sadd.s32 1, %s22
    $region7: #{tpu_custom_call.1} parent=1 // loop_footer_branch
      %21 = sbr.rel target = $region3
    $region8: #{tpu_custom_call.1} parent=1 // loop_exit
      _
    %483 = vsyncpa [#allocation4], 1
    %s484 = scalar_lea.sflag [#allocation4], 1
    %485 = vsyncpa %s484, 1
    %486 = vsyncpa [#allocation7], 1
    %487 = vsyncpa [#allocation5], 1
    %s488 = scalar_lea.sflag [#allocation5], 1
    %489 = vsyncpa %s488, 1
    %490 = vsyncpa [#allocation10], 1
    %s491 = scalar_lea.sflag [#allocation10], 1
    %492 = vsyncpa %s491, 1

</llo_original>
